<compile_context>
chip_gen: v5e
topology: v5e:2x2
jax: 0.10.0
libtpu: 0.0.40
codegen_flags: <defaults>
</compile_context>

<pallas_src>
import jax
import jax.numpy as jnp
from jax.experimental import pallas as pl
from jax.experimental.pallas import tpu as pltpu

# Logical (PyTorch nn.Linear) layer shapes and lane-aligned padded widths.
DIMS = [(325, 250), (250, 150), (150, 100), (100, 52)]
PAD_DIMS = [(384, 256), (256, 256), (256, 128), (128, 128)]
IN_DIM, OUT_DIM = 325, 52
IN_PAD, OUT_PAD = 384, 128

# Batch-tile cap: large enough to amortize the ~0.35us per-grid-step overhead,
# small enough to stay inside v5e's 16 MiB scoped-VMEM default.
TILE_CAP = 1024


def _round_up(x, m):
    return ((x + m - 1) // m) * m


def gioco_kernel(x_ref,
                 w1_ref, b1_ref,
                 w2_ref, b2_ref,
                 w3_ref, b3_ref,
                 w4_ref, b4_ref,
                 o_ref,
                 xpad_ref):
    # In-kernel cast + lane padding (325 -> 384): zero the scratch first so the
    # pad lanes are exactly 0 (not stale VMEM), then masked-store the bf16 rows.
    xpad_ref[...] = jnp.zeros_like(xpad_ref)
    xpad_ref[:, :IN_DIM] = x_ref[...].astype(jnp.bfloat16)
    x = xpad_ref[...]

    # IL: 384 -> 256 (logical 325 -> 250), ReLU.  bf16 MXU, f32 accumulate.
    h = jnp.dot(x, w1_ref[...], preferred_element_type=jnp.float32) + b1_ref[...]
    h = jnp.maximum(h, 0.0)

    # HL1: 256 -> 256 (250 -> 150), ReLU.
    h = jnp.dot(h.astype(jnp.bfloat16), w2_ref[...],
                preferred_element_type=jnp.float32) + b2_ref[...]
    h = jnp.maximum(h, 0.0)

    # HL2: 256 -> 128 (150 -> 100), ReLU.
    h = jnp.dot(h.astype(jnp.bfloat16), w3_ref[...],
                preferred_element_type=jnp.float32) + b3_ref[...]
    h = jnp.maximum(h, 0.0)

    # OL: 128 -> 128 (100 -> 52), sigmoid in f32 (EUP slot), store bf16.
    z = jnp.dot(h.astype(jnp.bfloat16), w4_ref[...],
                preferred_element_type=jnp.float32) + b4_ref[...]
    o_ref[...] = jax.nn.sigmoid(z).astype(o_ref.dtype)


def init_params(key):
    """Kaiming-uniform-ish init matching nn.Linear shapes (f32, unpadded)."""
    params = []
    for fan_in, fan_out in DIMS:
        kw, kb, key = jax.random.split(key, 3)
        bound = 1.0 / jnp.sqrt(jnp.float32(fan_in))
        w = jax.random.uniform(kw, (fan_in, fan_out), jnp.float32, -bound, bound)
        b = jax.random.uniform(kb, (1, fan_out), jnp.float32, -bound, bound)
        params.extend([w, b])
    return params


def pad_params(params):
    """Zero-pad to lane-aligned shapes; weights cast to bf16 once, biases f32."""
    padded = []
    for (w, b), (pi, po) in zip(zip(params[0::2], params[1::2]), PAD_DIMS):
        fi, fo = w.shape
        wp = jnp.pad(w, ((0, pi - fi), (0, po - fo))).astype(jnp.bfloat16)
        bp = jnp.pad(b, ((0, 0), (0, po - fo)))  # f32, zero on padded lanes
        padded.extend([wp, bp])
    return padded


def _choose_tile(rows):
    # Fewest tiles respecting TILE_CAP; round tile to 8 rows to satisfy the
    # (8, 128) block constraint while keeping padding waste < 8 rows per tile.
    num_tiles = pl.cdiv(rows, TILE_CAP)
    if rows > 256:
        num_tiles = max(num_tiles, 2)  # v7x: give both TensorCores work.
    return _round_up(pl.cdiv(rows, num_tiles), 8)


def _gioco_forward(game_state, memory, padded_params):
    # `memory` is accepted for API parity with the PyTorch module; the original
    # forward never uses it.
    del memory
    batch = game_state.shape[0]

    x = game_state
    rows = batch
    if rows < 8:
        # Tiny-batch guard: ensure the (single) block is at least 8 rows.
        x = jnp.pad(x, ((0, 8 - rows), (0, 0)))
        rows = 8

    tb = _choose_tile(rows)
    grid = (pl.cdiv(rows, tb),)

    # Unpadded f32 input goes straight in (block last dim == full array dim is
    # legal).  A ragged last batch tile is handled by Pallas bounds masking:
    # garbage rows only produce garbage rows, which are never written back.
    x_spec = pl.BlockSpec((tb, IN_DIM), lambda i: (i, 0))
    # Constant-index full blocks: weights/biases stay VMEM-resident.
    param_specs = [pl.BlockSpec(p.shape, lambda i: (0, 0)) for p in padded_params]
    # TODO(synk): on v7x, if profiling shows exposed input DMA, add
    # pipeline_mode=pl.Buffered(3) to x_spec.
    out_spec = pl.BlockSpec((tb, OUT_PAD), lambda i: (i, 0))

    out = pl.pallas_call(
        gioco_kernel,
        out_shape=jax.ShapeDtypeStruct((rows, OUT_PAD), jnp.bfloat16),
        grid=grid,
        in_specs=[x_spec] + param_specs,
        out_specs=out_spec,
        scratch_shapes=[pltpu.VMEM((tb, IN_PAD), jnp.bfloat16)],
        compiler_params=pltpu.CompilerParams(
            dimension_semantics=("parallel",)),
    )(x, *padded_params)

    # Slice away lane/row padding; under jit this fuses with any consumer.
    return out[:batch, :OUT_DIM]


gioco_forward = jax.jit(_gioco_forward)


def gioco_reference(game_state, params):
    """Pure-JAX reference with the same bf16-input / f32-accumulate recipe."""
    w1, b1, w2, b2, w3, b3, w4, b4 = params

    def lin(x, w, b):
        return jnp.dot(x.astype(jnp.bfloat16), w.astype(jnp.bfloat16),
                       preferred_element_type=jnp.float32) + b

    h = jnp.maximum(lin(game_state, w1, b1), 0.0)
    h = jnp.maximum(lin(h, w2, b2), 0.0)
    h = jnp.maximum(lin(h, w3, b3), 0.0)
    return jax.nn.sigmoid(lin(h, w4, b4))


if __name__ == "__main__":
    key = jax.random.PRNGKey(0)
    k_x, k_m, k_p, k_x2 = jax.random.split(key, 4)

    params = init_params(k_p)
    padded_params = pad_params(params)

    # Small-batch check (single grid step).
    batch = 8
    game_state = jax.random.normal(k_x, (batch, IN_DIM), jnp.float32)
    memory = jax.random.normal(k_m, (batch, 16), jnp.float32)  # unused by forward

    out = jax.block_until_ready(gioco_forward(game_state, memory, padded_params))
    ref = gioco_reference(game_state, params)
    assert out.shape == (batch, OUT_DIM)
    err = float(jnp.abs(out.astype(jnp.float32) - ref).max())
    assert err < 5e-3, err

    # Multi-tile check: non-divisible batch exercises adaptive tiling and the
    # ragged-last-block masking path (300 -> two 152-row tiles).
    batch2 = 300
    game_state2 = jax.random.normal(k_x2, (batch2, IN_DIM), jnp.float32)
    out2 = jax.block_until_ready(gioco_forward(game_state2, None, padded_params))
    ref2 = gioco_reference(game_state2, params)
    assert out2.shape == (batch2, OUT_DIM)
    err2 = float(jnp.abs(out2.astype(jnp.float32) - ref2).max())
    assert err2 < 5e-3, err2

    print("KERNEL_OK")
</pallas_src>

<mosaic_0001>
module attributes {stable_mosaic.version = 11 : i64} {
  func.func @gioco_kernel(%arg0: i32, %arg1: memref<8x325xf32, #tpu.memory_space<vmem>>, %arg2: memref<384x256xbf16, #tpu.memory_space<vmem>>, %arg3: memref<1x256xf32, #tpu.memory_space<vmem>>, %arg4: memref<256x256xbf16, #tpu.memory_space<vmem>>, %arg5: memref<1x256xf32, #tpu.memory_space<vmem>>, %arg6: memref<256x128xbf16, #tpu.memory_space<vmem>>, %arg7: memref<1x128xf32, #tpu.memory_space<vmem>>, %arg8: memref<128x128xbf16, #tpu.memory_space<vmem>>, %arg9: memref<1x128xf32, #tpu.memory_space<vmem>>, %arg10: memref<8x128xbf16, #tpu.memory_space<vmem>>, %arg11: memref<8x384xbf16, #tpu.memory_space<vmem>>) attributes {dimension_semantics = [#tpu.dimension_semantics<parallel>], iteration_bounds = array<i64: 1>, scalar_prefetch = 0 : i64, scratch_operands = 1 : i64, tpu.core_type = #tpu.core_type<tc>, window_params = [{transform_indices = @transform_0, window_bounds = array<i64: 8, 325>}, {pipeline_mode = #tpu.pipeline_mode<synchronous>, transform_indices = @transform_1, window_bounds = array<i64: 384, 256>}, {pipeline_mode = #tpu.pipeline_mode<synchronous>, transform_indices = @transform_2, window_bounds = array<i64: 1, 256>}, {pipeline_mode = #tpu.pipeline_mode<synchronous>, transform_indices = @transform_3, window_bounds = array<i64: 256, 256>}, {pipeline_mode = #tpu.pipeline_mode<synchronous>, transform_indices = @transform_4, window_bounds = array<i64: 1, 256>}, {pipeline_mode = #tpu.pipeline_mode<synchronous>, transform_indices = @transform_5, window_bounds = array<i64: 256, 128>}, {pipeline_mode = #tpu.pipeline_mode<synchronous>, transform_indices = @transform_6, window_bounds = array<i64: 1, 128>}, {pipeline_mode = #tpu.pipeline_mode<synchronous>, transform_indices = @transform_7, window_bounds = array<i64: 128, 128>}, {pipeline_mode = #tpu.pipeline_mode<synchronous>, transform_indices = @transform_8, window_bounds = array<i64: 1, 128>}, {transform_indices = @transform_9, window_bounds = array<i64: 8, 128>}]} {
    %cst = arith.constant 0.000000e+00 : bf16
    %0 = vector.broadcast %cst : bf16 to vector<8x384xbf16>
    %c0 = arith.constant 0 : index
    %c0_0 = arith.constant 0 : index
    %1 = vector.load %arg11[%c0, %c0_0] : memref<8x384xbf16, #tpu.memory_space<vmem>>, vector<8x384xbf16>
    tpu.vector_store %arg11[%c0, %c0_0], %0 {strides = array<i32>} : memref<8x384xbf16, #tpu.memory_space<vmem>>, vector<8x384xbf16>,
    %c0_1 = arith.constant 0 : index
    %c0_2 = arith.constant 0 : index
    %2 = vector.load %arg1[%c0_1, %c0_2] : memref<8x325xf32, #tpu.memory_space<vmem>>, vector<8x325xf32>
    %3 = arith.truncf %2 : vector<8x325xf32> to vector<8x325xbf16>
    %c0_3 = arith.constant 0 : index
    %c0_4 = arith.constant 0 : index
    %4 = vector.load %arg11[%c0_3, %c0_4] : memref<8x384xbf16, #tpu.memory_space<vmem>>, vector<8x325xbf16>
    tpu.vector_store %arg11[%c0_3, %c0_4], %3 {strides = array<i32>} : memref<8x384xbf16, #tpu.memory_space<vmem>>, vector<8x325xbf16>,
    %c0_5 = arith.constant 0 : index
    %c0_6 = arith.constant 0 : index
    %5 = vector.load %arg11[%c0_5, %c0_6] : memref<8x384xbf16, #tpu.memory_space<vmem>>, vector<8x384xbf16>
    %c0_7 = arith.constant 0 : index
    %c0_8 = arith.constant 0 : index
    %6 = vector.load %arg2[%c0_7, %c0_8] : memref<384x256xbf16, #tpu.memory_space<vmem>>, vector<384x256xbf16>
    %cst_9 = arith.constant dense<0.000000e+00> : vector<8x256xf32>
    %7 = tpu.matmul %5, %6, %cst_9 {dimension_numbers = #tpu.dot_dimension_numbers<[1], [0], [0], [1], [0, 0, 1, 1], [], []>} : vector<8x384xbf16>, vector<384x256xbf16>, vector<8x256xf32> -> vector<8x256xf32>
    %c0_10 = arith.constant 0 : index
    %c0_11 = arith.constant 0 : index
    %8 = vector.load %arg3[%c0_10, %c0_11] : memref<1x256xf32, #tpu.memory_space<vmem>>, vector<1x256xf32>
    %9 = vector.broadcast %8 : vector<1x256xf32> to vector<8x256xf32>
    %10 = arith.addf %7, %9 : vector<8x256xf32>
    %cst_12 = arith.constant 0.000000e+00 : f32
    %11 = vector.broadcast %cst_12 : f32 to vector<8x256xf32>
    %12 = arith.maximumf %10, %11 : vector<8x256xf32>
    %13 = arith.truncf %12 : vector<8x256xf32> to vector<8x256xbf16>
    %c0_13 = arith.constant 0 : index
    %c0_14 = arith.constant 0 : index
    %14 = vector.load %arg4[%c0_13, %c0_14] : memref<256x256xbf16, #tpu.memory_space<vmem>>, vector<256x256xbf16>
    %cst_15 = arith.constant dense<0.000000e+00> : vector<8x256xf32>
    %15 = tpu.matmul %13, %14, %cst_15 {dimension_numbers = #tpu.dot_dimension_numbers<[1], [0], [0], [1], [0, 0, 1, 1], [], []>} : vector<8x256xbf16>, vector<256x256xbf16>, vector<8x256xf32> -> vector<8x256xf32>
    %c0_16 = arith.constant 0 : index
    %c0_17 = arith.constant 0 : index
    %16 = vector.load %arg5[%c0_16, %c0_17] : memref<1x256xf32, #tpu.memory_space<vmem>>, vector<1x256xf32>
    %17 = vector.broadcast %16 : vector<1x256xf32> to vector<8x256xf32>
    %18 = arith.addf %15, %17 : vector<8x256xf32>
    %cst_18 = arith.constant 0.000000e+00 : f32
    %19 = vector.broadcast %cst_18 : f32 to vector<8x256xf32>
    %20 = arith.maximumf %18, %19 : vector<8x256xf32>
    %21 = arith.truncf %20 : vector<8x256xf32> to vector<8x256xbf16>
    %c0_19 = arith.constant 0 : index
    %c0_20 = arith.constant 0 : index
    %22 = vector.load %arg6[%c0_19, %c0_20] : memref<256x128xbf16, #tpu.memory_space<vmem>>, vector<256x128xbf16>
    %cst_21 = arith.constant dense<0.000000e+00> : vector<8x128xf32>
    %23 = tpu.matmul %21, %22, %cst_21 {dimension_numbers = #tpu.dot_dimension_numbers<[1], [0], [0], [1], [0, 0, 1, 1], [], []>} : vector<8x256xbf16>, vector<256x128xbf16>, vector<8x128xf32> -> vector<8x128xf32>
    %c0_22 = arith.constant 0 : index
    %c0_23 = arith.constant 0 : index
    %24 = vector.load %arg7[%c0_22, %c0_23] : memref<1x128xf32, #tpu.memory_space<vmem>>, vector<1x128xf32>
    %25 = vector.broadcast %24 : vector<1x128xf32> to vector<8x128xf32>
    %26 = arith.addf %23, %25 : vector<8x128xf32>
    %cst_24 = arith.constant 0.000000e+00 : f32
    %27 = vector.broadcast %cst_24 : f32 to vector<8x128xf32>
    %28 = arith.maximumf %26, %27 : vector<8x128xf32>
    %29 = arith.truncf %28 : vector<8x128xf32> to vector<8x128xbf16>
    %c0_25 = arith.constant 0 : index
    %c0_26 = arith.constant 0 : index
    %30 = vector.load %arg8[%c0_25, %c0_26] : memref<128x128xbf16, #tpu.memory_space<vmem>>, vector<128x128xbf16>
    %cst_27 = arith.constant dense<0.000000e+00> : vector<8x128xf32>
    %31 = tpu.matmul %29, %30, %cst_27 {dimension_numbers = #tpu.dot_dimension_numbers<[1], [0], [0], [1], [0, 0, 1, 1], [], []>} : vector<8x128xbf16>, vector<128x128xbf16>, vector<8x128xf32> -> vector<8x128xf32>
    %c0_28 = arith.constant 0 : index
    %c0_29 = arith.constant 0 : index
    %32 = vector.load %arg9[%c0_28, %c0_29] : memref<1x128xf32, #tpu.memory_space<vmem>>, vector<1x128xf32>
    %33 = vector.broadcast %32 : vector<1x128xf32> to vector<8x128xf32>
    %34 = arith.addf %31, %33 : vector<8x128xf32>
    %35 = arith.negf %34 : vector<8x128xf32>
    %36 = math.exp %35 : vector<8x128xf32>
    %cst_30 = arith.constant 1.000000e+00 : f32
    %37 = vector.broadcast %cst_30 : f32 to vector<8x128xf32>
    %38 = arith.addf %37, %36 : vector<8x128xf32>
    %39 = arith.divf %37, %38 : vector<8x128xf32>
    %40 = arith.truncf %39 : vector<8x128xf32> to vector<8x128xbf16>
    %c0_31 = arith.constant 0 : index
    %c0_32 = arith.constant 0 : index
    %41 = vector.load %arg10[%c0_31, %c0_32] : memref<8x128xbf16, #tpu.memory_space<vmem>>, vector<8x128xbf16>
    tpu.vector_store %arg10[%c0_31, %c0_32], %40 {strides = array<i32>} : memref<8x128xbf16, #tpu.memory_space<vmem>>, vector<8x128xbf16>,
    return
  }
  func.func @transform_0(%arg0: i32) -> (i32, i32) {
    %c0_i32 = arith.constant 0 : i32
    %c0_i32_0 = arith.constant 0 : i32
    return %arg0, %c0_i32 : i32, i32
  }
  func.func @transform_1(%arg0: i32) -> (i32, i32) {
    %c0_i32 = arith.constant 0 : i32
    %c0_i32_0 = arith.constant 0 : i32
    %c0_i32_1 = arith.constant 0 : i32
    return %c0_i32, %c0_i32_0 : i32, i32
  }
  func.func @transform_2(%arg0: i32) -> (i32, i32) {
    %c0_i32 = arith.constant 0 : i32
    %c0_i32_0 = arith.constant 0 : i32
    %c0_i32_1 = arith.constant 0 : i32
    return %c0_i32, %c0_i32_0 : i32, i32
  }
  func.func @transform_3(%arg0: i32) -> (i32, i32) {
    %c0_i32 = arith.constant 0 : i32
    %c0_i32_0 = arith.constant 0 : i32
    %c0_i32_1 = arith.constant 0 : i32
    return %c0_i32, %c0_i32_0 : i32, i32
  }
  func.func @transform_4(%arg0: i32) -> (i32, i32) {
    %c0_i32 = arith.constant 0 : i32
    %c0_i32_0 = arith.constant 0 : i32
    %c0_i32_1 = arith.constant 0 : i32
    return %c0_i32, %c0_i32_0 : i32, i32
  }
  func.func @transform_5(%arg0: i32) -> (i32, i32) {
    %c0_i32 = arith.constant 0 : i32
    %c0_i32_0 = arith.constant 0 : i32
    %c0_i32_1 = arith.constant 0 : i32
    return %c0_i32, %c0_i32_0 : i32, i32
  }
  func.func @transform_6(%arg0: i32) -> (i32, i32) {
    %c0_i32 = arith.constant 0 : i32
    %c0_i32_0 = arith.constant 0 : i32
    %c0_i32_1 = arith.constant 0 : i32
    return %c0_i32, %c0_i32_0 : i32, i32
  }
  func.func @transform_7(%arg0: i32) -> (i32, i32) {
    %c0_i32 = arith.constant 0 : i32
    %c0_i32_0 = arith.constant 0 : i32
    %c0_i32_1 = arith.constant 0 : i32
    return %c0_i32, %c0_i32_0 : i32, i32
  }
  func.func @transform_8(%arg0: i32) -> (i32, i32) {
    %c0_i32 = arith.constant 0 : i32
    %c0_i32_0 = arith.constant 0 : i32
    %c0_i32_1 = arith.constant 0 : i32
    return %c0_i32, %c0_i32_0 : i32, i32
  }
  func.func @transform_9(%arg0: i32) -> (i32, i32) {
    %c0_i32 = arith.constant 0 : i32
    %c0_i32_0 = arith.constant 0 : i32
    return %arg0, %c0_i32 : i32, i32
  }
}

</mosaic_0001>

<llo_original>
// kernel: _gioco_forward.1
$region0: #{_gioco_forward.1}
  #allocation0 [shape = 'u32[]', space=smem, size = 0x4, offset = 0x4, fixed_abs, tag = 'smem constant byte address 0x4 - core index']
  #allocation1 [shape = 'u32[72,128]{1,0:T(1,128)}', space=vmem, size = 0x9000, scoped, tag = 'internal scratch']
  #allocation2 [shape = 'bf16[8,384]{1,0:T(8,128)(2,1)}', space=vmem, size = 0x1800, scoped, tag = 'scratch operand']
  %s0 = inlined_call_operand.hbm [shape: f32[8,325], index: 0, kind: input, shape index: {}]
  %s1 = inlined_call_operand.hbm [shape: bf16[384,256], index: 1, kind: input, shape index: {}]
  %s2 = inlined_call_operand.hbm [shape: f32[1,256], index: 2, kind: input, shape index: {}]
  %s3 = inlined_call_operand.hbm [shape: bf16[256,256], index: 3, kind: input, shape index: {}]
  %s4 = inlined_call_operand.vmem [shape: f32[1,256], index: 4, kind: input, shape index: {}]
  %s5 = inlined_call_operand.hbm [shape: bf16[256,128], index: 5, kind: input, shape index: {}]
  %s6 = inlined_call_operand.vmem [shape: f32[1,128], index: 6, kind: input, shape index: {}]
  %s7 = inlined_call_operand.hbm [shape: bf16[128,128], index: 7, kind: input, shape index: {}]
  %s8 = inlined_call_operand.vmem [shape: f32[1,128], index: 8, kind: input, shape index: {}]
  %s9 = inlined_call_operand.hbm [shape: bf16[8,128], index: 9, kind: output, shape index: {}]
  %s10 = sld [smem:[#allocation0]]
  $region70: #{_gioco_forward.1} parent=0
    _
  %s12 = ssub.s32 1, %s10
  %s13 = scalar_select 0, %s12, %s10
  $region1: #{_gioco_forward.1} parent=0
    #allocation3 [shape = 'u8[12288]{0}', space=vmem, size = 0x3000, scoped, tag = 'input window, operand 0, single buffered']
    #allocation4 [shape = 's32[1]{0}', space=sflag, size = 0x4, scoped, tag = 'scoped memory for _gioco_forward.1']
    #allocation5 [shape = 's32[1]{0}', space=sflag, size = 0x4, scoped, tag = 'scoped memory for _gioco_forward.1']
    #allocation6 [shape = 'u8[196608]{0}', space=vmem, size = 0x30000, scoped, tag = 'input window, operand 1, single buffered']
    #allocation7 [shape = 's32[1]{0}', space=sflag, size = 0x4, scoped, tag = 'scoped memory for _gioco_forward.1']
    #allocation8 [shape = 'u8[1024]{0}', space=vmem, size = 0x400, scoped, tag = 'input window, operand 2, single buffered']
    #allocation9 [shape = 'u8[131072]{0}', space=vmem, size = 0x20000, scoped, tag = 'input window, operand 3, single buffered']
    #allocation10 [shape = 's32[1]{0}', space=sflag, size = 0x4, scoped, tag = 'scoped memory for _gioco_forward.1']
    #allocation11 [shape = 'u8[65536]{0}', space=vmem, size = 0x10000, scoped, tag = 'input window, operand 5, single buffered']
    #allocation12 [shape = 'u8[32768]{0}', space=vmem, size = 0x8000, scoped, tag = 'input window, operand 7, single buffered']
    #allocation13 [shape = 's32[1]{0}', space=sflag, size = 0x4, scoped, tag = 'scoped memory for _gioco_forward.1']
    #allocation14 [shape = 'u8[2048]{0}', space=vmem, size = 0x800, scoped, tag = 'output window, operand 0, single buffered']
    %14 = vsyncpa [#allocation4], 0
    %15 = vsyncpa [#allocation7], 0
    %16 = vsyncpa [#allocation10], 0
    %17 = vsyncpa [#allocation13], 0
    %18 = vsyncpa [#allocation5], 0
    // Predicated region
    $region2: #{_gioco_forward.1} parent=1 // pred_check
      _
    $region3: #{_gioco_forward.1} parent=1 // pred_check_branch
      %20 = sbr.rel (0) target = $region5
    $region4: #{_gioco_forward.1} parent=1 // pred_region
      %22 = vsyncadd [#allocation4], 0
      %s24 = sshll.u32 %s0, 4
      %s25 = int_to_ptr.hbm [resolvable:$true] %s24
      %s26 = sshll.u32 [#allocation3], 4
      %s27 = int_to_ptr.vmem [resolvable:$true] %s26
      %29 = dma.hbm_to_vmem [thread:$0]  %s25, 384, %s27, [#allocation4]
    $region5: #{_gioco_forward.1} parent=1 // pred_fallthru
      _
    // Predicated region
    $region6: #{_gioco_forward.1} parent=1 // pred_check
      _
    $region7: #{_gioco_forward.1} parent=1 // pred_check_branch
      %31 = sbr.rel (0) target = $region9
    $region8: #{_gioco_forward.1} parent=1 // pred_region
      %33 = vsyncadd [#allocation7], 0
      %s34 = sshll.u32 %s1, 4
      %s35 = int_to_ptr.hbm [resolvable:$true] %s34
      %s36 = sshll.u32 [#allocation6], 4
      %s37 = int_to_ptr.vmem [resolvable:$true] %s36
      %42 = dma.hbm_to_vmem [thread:$0]  %s35, 6144, %s37, [#allocation7], 128, 128, 8
    $region9: #{_gioco_forward.1} parent=1 // pred_fallthru
      _
    // Predicated region
    $region10: #{_gioco_forward.1} parent=1 // pred_check
      _
    $region11: #{_gioco_forward.1} parent=1 // pred_check_branch
      %44 = sbr.rel (0) target = $region13
    $region12: #{_gioco_forward.1} parent=1 // pred_region
      %46 = vsyncadd [#allocation7], 0
      %s48 = sshll.u32 %s2, 4
      %s49 = int_to_ptr.hbm [resolvable:$true] %s48
      %s50 = sshll.u32 [#allocation8], 4
      %s51 = int_to_ptr.vmem [resolvable:$true] %s50
      %53 = dma.hbm_to_vmem [thread:$0]  %s49, 32, %s51, [#allocation7]
    $region13: #{_gioco_forward.1} parent=1 // pred_fallthru
      _
    // Predicated region
    $region14: #{_gioco_forward.1} parent=1 // pred_check
      _
    $region15: #{_gioco_forward.1} parent=1 // pred_check_branch
      %55 = sbr.rel (0) target = $region17
    $region16: #{_gioco_forward.1} parent=1 // pred_region
      %57 = vsyncadd [#allocation10], 0
      %s58 = sshll.u32 %s3, 4
      %s59 = int_to_ptr.hbm [resolvable:$true] %s58
      %s60 = sshll.u32 [#allocation9], 4
      %s61 = int_to_ptr.vmem [resolvable:$true] %s60
      %66 = dma.hbm_to_vmem [thread:$0]  %s59, 4096, %s61, [#allocation10], 128, 128, 8
    $region17: #{_gioco_forward.1} parent=1 // pred_fallthru
      _
    // Predicated region
    $region18: #{_gioco_forward.1} parent=1 // pred_check
      _
    $region19: #{_gioco_forward.1} parent=1 // pred_check_branch
      %68 = sbr.rel (0) target = $region21
    $region20: #{_gioco_forward.1} parent=1 // pred_region
      _
    $region21: #{_gioco_forward.1} parent=1 // pred_fallthru
      _
    // Predicated region
    $region22: #{_gioco_forward.1} parent=1 // pred_check
      _
    $region23: #{_gioco_forward.1} parent=1 // pred_check_branch
      %70 = sbr.rel (0) target = $region25
    $region24: #{_gioco_forward.1} parent=1 // pred_region
      %72 = vsyncadd [#allocation10], 0
      %s73 = sshll.u32 %s5, 4
      %s74 = int_to_ptr.hbm [resolvable:$true] %s73
      %s75 = sshll.u32 [#allocation11], 4
      %s76 = int_to_ptr.vmem [resolvable:$true] %s75
      %81 = dma.hbm_to_vmem [thread:$0]  %s74, 2048, %s76, [#allocation10], 64, 64, 4
    $region25: #{_gioco_forward.1} parent=1 // pred_fallthru
      _
    // Predicated region
    $region26: #{_gioco_forward.1} parent=1 // pred_check
      _
    $region27: #{_gioco_forward.1} parent=1 // pred_check_branch
      %83 = sbr.rel (0) target = $region29
    $region28: #{_gioco_forward.1} parent=1 // pred_region
      _
    $region29: #{_gioco_forward.1} parent=1 // pred_fallthru
      _
    // Predicated region
    $region30: #{_gioco_forward.1} parent=1 // pred_check
      _
    $region31: #{_gioco_forward.1} parent=1 // pred_check_branch
      %85 = sbr.rel (0) target = $region33
    $region32: #{_gioco_forward.1} parent=1 // pred_region
      %87 = vsyncadd [#allocation13], 0
      %s88 = sshll.u32 %s7, 4
      %s89 = int_to_ptr.hbm [resolvable:$true] %s88
      %s90 = sshll.u32 [#allocation12], 4
      %s91 = int_to_ptr.vmem [resolvable:$true] %s90
      %96 = dma.hbm_to_vmem [thread:$0]  %s89, 1024, %s91, [#allocation13], 64, 64, 4
    $region33: #{_gioco_forward.1} parent=1 // pred_fallthru
      _
    // Predicated region
    $region34: #{_gioco_forward.1} parent=1 // pred_check
      _
    $region35: #{_gioco_forward.1} parent=1 // pred_check_branch
      %98 = sbr.rel (0) target = $region37
    $region36: #{_gioco_forward.1} parent=1 // pred_region
      _
    $region37: #{_gioco_forward.1} parent=1 // pred_fallthru
      _
    // Predicated region
    $region38: #{_gioco_forward.1} parent=1 // pred_check
      _
    $region39: #{_gioco_forward.1} parent=1 // pred_check_branch
      %100 = sbr.rel (0) target = $region41
    $region40: #{_gioco_forward.1} parent=1 // pred_region
      %102 = dma.done [#allocation4], 384
    $region41: #{_gioco_forward.1} parent=1 // pred_fallthru
      _
    // Predicated region
    $region42: #{_gioco_forward.1} parent=1 // pred_check
      _
    $region43: #{_gioco_forward.1} parent=1 // pred_check_branch
      %104 = sbr.rel (0) target = $region45
    $region44: #{_gioco_forward.1} parent=1 // pred_region
      %106 = dma.done [#allocation7], 6144
    $region45: #{_gioco_forward.1} parent=1 // pred_fallthru
      _
    // Predicated region
    $region46: #{_gioco_forward.1} parent=1 // pred_check
      _
    $region47: #{_gioco_forward.1} parent=1 // pred_check_branch
      %108 = sbr.rel (0) target = $region49
    $region48: #{_gioco_forward.1} parent=1 // pred_region
      %110 = dma.done [#allocation7], 32
    $region49: #{_gioco_forward.1} parent=1 // pred_fallthru
      _
    // Predicated region
    $region50: #{_gioco_forward.1} parent=1 // pred_check
      _
    $region51: #{_gioco_forward.1} parent=1 // pred_check_branch
      %112 = sbr.rel (0) target = $region53
    $region52: #{_gioco_forward.1} parent=1 // pred_region
      %114 = dma.done [#allocation10], 4096
    $region53: #{_gioco_forward.1} parent=1 // pred_fallthru
      _
    // Predicated region
    $region54: #{_gioco_forward.1} parent=1 // pred_check
      _
    $region55: #{_gioco_forward.1} parent=1 // pred_check_branch
      %116 = sbr.rel (0) target = $region57
    $region56: #{_gioco_forward.1} parent=1 // pred_region
      %118 = dma.done [#allocation10], 2048
    $region57: #{_gioco_forward.1} parent=1 // pred_fallthru
      _
    // Predicated region
    $region58: #{_gioco_forward.1} parent=1 // pred_check
      _
    $region59: #{_gioco_forward.1} parent=1 // pred_check_branch
      %120 = sbr.rel (0) target = $region61
    $region60: #{_gioco_forward.1} parent=1 // pred_region
      %122 = dma.done [#allocation13], 1024
    $region61: #{_gioco_forward.1} parent=1 // pred_fallthru
      _
    %124 = vst [vmem:[#allocation2] sm:$0xff] 0
    %125 = vst [vmem:[#allocation2 + $0x8] sm:$0xf] 0
    %v126 = vld [vmem:[#allocation3] sm:$0xff]
    %v127 = vld [vmem:[#allocation3 + $0x8] sm:$0xff]
    %v128 = vld [vmem:[#allocation3 + $0x10] sm:$0xff]
    %v129 = vpack.c.bf16 %v127, %v126
    %v130 = vpack.c.bf16 %v128, %v128
    %131 = vst [vmem:[#allocation2] sm:$0xff] %v129
    %vm132 = vcmask 560128
    %133 = vst.msk [vmem:[#allocation2 + $0x8] sm:$0xf] %vm132, %v130
    %v134 = vld [vmem:[#allocation2] sm:$0xff]
    %v135 = vld [vmem:[#allocation2 + $0x8] sm:$0xf]
    %v136 = vld [vmem:[#allocation6] sm:$0xff]
    %v137 = vld [vmem:[#allocation6 + $0x8] sm:$0xff]
    %v138 = vld [vmem:[#allocation6 + $0x10] sm:$0xff]
    %v139 = vld [vmem:[#allocation6 + $0x18] sm:$0xff]
    %v140 = vld [vmem:[#allocation6 + $0x20] sm:$0xff]
    %v141 = vld [vmem:[#allocation6 + $0x28] sm:$0xff]
    %v142 = vld [vmem:[#allocation6 + $0x30] sm:$0xff]
    %v143 = vld [vmem:[#allocation6 + $0x38] sm:$0xff]
    %v144 = vld [vmem:[#allocation6 + $0x40] sm:$0xff]
    %v145 = vld [vmem:[#allocation6 + $0x48] sm:$0xff]
    %v146 = vld [vmem:[#allocation6 + $0x50] sm:$0xff]
    %v147 = vld [vmem:[#allocation6 + $0x58] sm:$0xff]
    %v148 = vld [vmem:[#allocation6 + $0x60] sm:$0xff]
    %v149 = vld [vmem:[#allocation6 + $0x68] sm:$0xff]
    %v150 = vld [vmem:[#allocation6 + $0x70] sm:$0xff]
    %v151 = vld [vmem:[#allocation6 + $0x78] sm:$0xff]
    %v152 = vld [vmem:[#allocation6 + $0x80] sm:$0xff]
    %v153 = vld [vmem:[#allocation6 + $0x88] sm:$0xff]
    %v154 = vld [vmem:[#allocation6 + $0x90] sm:$0xff]
    %v155 = vld [vmem:[#allocation6 + $0x98] sm:$0xff]
    %v156 = vld [vmem:[#allocation6 + $0xa0] sm:$0xff]
    %v157 = vld [vmem:[#allocation6 + $0xa8] sm:$0xff]
    %v158 = vld [vmem:[#allocation6 + $0xb0] sm:$0xff]
    %v159 = vld [vmem:[#allocation6 + $0xb8] sm:$0xff]
    %v160 = vld [vmem:[#allocation6 + $0xc0] sm:$0xff]
    %v161 = vld [vmem:[#allocation6 + $0xc8] sm:$0xff]
    %v162 = vld [vmem:[#allocation6 + $0xd0] sm:$0xff]
    %v163 = vld [vmem:[#allocation6 + $0xd8] sm:$0xff]
    %v164 = vld [vmem:[#allocation6 + $0xe0] sm:$0xff]
    %v165 = vld [vmem:[#allocation6 + $0xe8] sm:$0xff]
    %v166 = vld [vmem:[#allocation6 + $0xf0] sm:$0xff]
    %v167 = vld [vmem:[#allocation6 + $0xf8] sm:$0xff]
    %v168 = vld [vmem:[#allocation6 + $0x100] sm:$0xff]
    %v169 = vld [vmem:[#allocation6 + $0x108] sm:$0xff]
    %v170 = vld [vmem:[#allocation6 + $0x110] sm:$0xff]
    %v171 = vld [vmem:[#allocation6 + $0x118] sm:$0xff]
    %v172 = vld [vmem:[#allocation6 + $0x120] sm:$0xff]
    %v173 = vld [vmem:[#allocation6 + $0x128] sm:$0xff]
    %v174 = vld [vmem:[#allocation6 + $0x130] sm:$0xff]
    %v175 = vld [vmem:[#allocation6 + $0x138] sm:$0xff]
    %v176 = vld [vmem:[#allocation6 + $0x140] sm:$0xff]
    %v177 = vld [vmem:[#allocation6 + $0x148] sm:$0xff]
    %v178 = vld [vmem:[#allocation6 + $0x150] sm:$0xff]
    %v179 = vld [vmem:[#allocation6 + $0x158] sm:$0xff]
    %v180 = vld [vmem:[#allocation6 + $0x160] sm:$0xff]
    %v181 = vld [vmem:[#allocation6 + $0x168] sm:$0xff]
    %v182 = vld [vmem:[#allocation6 + $0x170] sm:$0xff]
    %v183 = vld [vmem:[#allocation6 + $0x178] sm:$0xff]
    %v184 = vld [vmem:[#allocation8] sm:$0x3]
    %v186 = vperm.slane %v184, 0
    %v187 = vperm.slane %v184, 1
    %v192 = vunpack.c.l.b16 %v134
    %v193 = vunpack.c.h.b16 %v134
    %v194 = vunpack.c.l.b16 %v135
    %v195 = vpack.c.b16 %v192, %v192
    %v196 = vpack.c.b16 %v193, %v193
    %v197 = vpack.c.b16 %v194, %v194
    %v249 = vunpack.c.l.b16 %v136
    %v250 = vunpack.c.h.b16 %v136
    %v251 = vunpack.c.l.b16 %v137
    %v252 = vunpack.c.h.b16 %v137
    %v253 = vunpack.c.l.b16 %v138
    %v254 = vunpack.c.h.b16 %v138
    %v255 = vunpack.c.l.b16 %v139
    %v256 = vunpack.c.h.b16 %v139
    %v257 = vunpack.c.l.b16 %v140
    %v258 = vunpack.c.h.b16 %v140
    %v259 = vunpack.c.l.b16 %v141
    %v260 = vunpack.c.h.b16 %v141
    %v261 = vunpack.c.l.b16 %v142
    %v262 = vunpack.c.h.b16 %v142
    %v263 = vunpack.c.l.b16 %v143
    %v264 = vunpack.c.h.b16 %v143
    %v265 = vunpack.c.l.b16 %v144
    %v266 = vunpack.c.h.b16 %v144
    %v267 = vunpack.c.l.b16 %v145
    %v268 = vunpack.c.h.b16 %v145
    %v269 = vunpack.c.l.b16 %v146
    %v270 = vunpack.c.h.b16 %v146
    %v271 = vunpack.c.l.b16 %v147
    %v272 = vunpack.c.h.b16 %v147
    %v273 = vunpack.c.l.b16 %v148
    %v274 = vunpack.c.h.b16 %v148
    %v275 = vunpack.c.l.b16 %v149
    %v276 = vunpack.c.h.b16 %v149
    %v277 = vunpack.c.l.b16 %v150
    %v278 = vunpack.c.h.b16 %v150
    %v279 = vunpack.c.l.b16 %v151
    %v280 = vunpack.c.h.b16 %v151
    %v281 = vunpack.c.l.b16 %v152
    %v282 = vunpack.c.h.b16 %v152
    %v283 = vunpack.c.l.b16 %v153
    %v284 = vunpack.c.h.b16 %v153
    %v285 = vunpack.c.l.b16 %v154
    %v286 = vunpack.c.h.b16 %v154
    %v287 = vunpack.c.l.b16 %v155
    %v288 = vunpack.c.h.b16 %v155
    %v289 = vunpack.c.l.b16 %v156
    %v290 = vunpack.c.h.b16 %v156
    %v291 = vunpack.c.l.b16 %v157
    %v292 = vunpack.c.h.b16 %v157
    %v293 = vunpack.c.l.b16 %v158
    %v294 = vunpack.c.h.b16 %v158
    %v295 = vunpack.c.l.b16 %v159
    %v296 = vunpack.c.h.b16 %v159
    %v297 = vunpack.c.l.b16 %v160
    %v298 = vunpack.c.h.b16 %v160
    %v299 = vunpack.c.l.b16 %v161
    %v300 = vunpack.c.h.b16 %v161
    %v301 = vunpack.c.l.b16 %v162
    %v302 = vunpack.c.h.b16 %v162
    %v303 = vunpack.c.l.b16 %v163
    %v304 = vunpack.c.h.b16 %v163
    %v305 = vunpack.c.l.b16 %v164
    %v306 = vunpack.c.h.b16 %v164
    %v307 = vunpack.c.l.b16 %v165
    %v308 = vunpack.c.h.b16 %v165
    %v309 = vunpack.c.l.b16 %v166
    %v310 = vunpack.c.h.b16 %v166
    %v311 = vunpack.c.l.b16 %v167
    %v312 = vunpack.c.h.b16 %v167
    %v313 = vunpack.c.l.b16 %v168
    %v314 = vunpack.c.h.b16 %v168
    %v315 = vunpack.c.l.b16 %v169
    %v316 = vunpack.c.h.b16 %v169
    %v317 = vunpack.c.l.b16 %v170
    %v318 = vunpack.c.h.b16 %v170
    %v319 = vunpack.c.l.b16 %v171
    %v320 = vunpack.c.h.b16 %v171
    %v321 = vunpack.c.l.b16 %v172
    %v322 = vunpack.c.h.b16 %v172
    %v323 = vunpack.c.l.b16 %v173
    %v324 = vunpack.c.h.b16 %v173
    %v325 = vunpack.c.l.b16 %v174
    %v326 = vunpack.c.h.b16 %v174
    %v327 = vunpack.c.l.b16 %v175
    %v328 = vunpack.c.h.b16 %v175
    %v329 = vunpack.c.l.b16 %v176
    %v330 = vunpack.c.h.b16 %v176
    %v331 = vunpack.c.l.b16 %v177
    %v332 = vunpack.c.h.b16 %v177
    %v333 = vunpack.c.l.b16 %v178
    %v334 = vunpack.c.h.b16 %v178
    %v335 = vunpack.c.l.b16 %v179
    %v336 = vunpack.c.h.b16 %v179
    %v337 = vunpack.c.l.b16 %v180
    %v338 = vunpack.c.h.b16 %v180
    %v339 = vunpack.c.l.b16 %v181
    %v340 = vunpack.c.h.b16 %v181
    %v341 = vunpack.c.l.b16 %v182
    %v342 = vunpack.c.h.b16 %v182
    %v343 = vunpack.c.l.b16 %v183
    %v344 = vunpack.c.h.b16 %v183
    %v345 = vpack.c.b16 %v251, %v249
    %v346 = vpack.c.b16 %v252, %v250
    %v347 = vpack.c.b16 %v255, %v253
    %v348 = vpack.c.b16 %v256, %v254
    %v349 = vpack.c.b16 %v259, %v257
    %v350 = vpack.c.b16 %v260, %v258
    %v351 = vpack.c.b16 %v263, %v261
    %v352 = vpack.c.b16 %v264, %v262
    %v353 = vpack.c.b16 %v267, %v265
    %v354 = vpack.c.b16 %v268, %v266
    %v355 = vpack.c.b16 %v271, %v269
    %v356 = vpack.c.b16 %v272, %v270
    %v357 = vpack.c.b16 %v275, %v273
    %v358 = vpack.c.b16 %v276, %v274
    %v359 = vpack.c.b16 %v279, %v277
    %v360 = vpack.c.b16 %v280, %v278
    %v361 = vpack.c.b16 %v283, %v281
    %v362 = vpack.c.b16 %v284, %v282
    %v363 = vpack.c.b16 %v287, %v285
    %v364 = vpack.c.b16 %v288, %v286
    %v365 = vpack.c.b16 %v291, %v289
    %v366 = vpack.c.b16 %v292, %v290
    %v367 = vpack.c.b16 %v295, %v293
    %v368 = vpack.c.b16 %v296, %v294
    %v369 = vpack.c.b16 %v299, %v297
    %v370 = vpack.c.b16 %v300, %v298
    %v371 = vpack.c.b16 %v303, %v301
    %v372 = vpack.c.b16 %v304, %v302
    %v373 = vpack.c.b16 %v307, %v305
    %v374 = vpack.c.b16 %v308, %v306
    %v375 = vpack.c.b16 %v311, %v309
    %v376 = vpack.c.b16 %v312, %v310
    %v377 = vpack.c.b16 %v315, %v313
    %v378 = vpack.c.b16 %v316, %v314
    %v379 = vpack.c.b16 %v319, %v317
    %v380 = vpack.c.b16 %v320, %v318
    %v381 = vpack.c.b16 %v323, %v321
    %v382 = vpack.c.b16 %v324, %v322
    %v383 = vpack.c.b16 %v327, %v325
    %v384 = vpack.c.b16 %v328, %v326
    %v385 = vpack.c.b16 %v331, %v329
    %v386 = vpack.c.b16 %v332, %v330
    %v387 = vpack.c.b16 %v335, %v333
    %v388 = vpack.c.b16 %v336, %v334
    %v389 = vpack.c.b16 %v339, %v337
    %v390 = vpack.c.b16 %v340, %v338
    %v391 = vpack.c.b16 %v343, %v341
    %v392 = vpack.c.b16 %v344, %v342
    %441 = vmatpush.bf16.msra.mxu0 %v359
    %442 = vmatpush.bf16.msra.mxu0 %v357
    %443 = vmatpush.bf16.msra.mxu0 %v355
    %444 = vmatpush.bf16.msra.mxu0 %v353
    %445 = vmatpush.bf16.msra.mxu0 %v351
    %446 = vmatpush.bf16.msra.mxu0 %v349
    %447 = vmatpush.bf16.msra.mxu0 %v347
    %448 = vmatpush.bf16.msra.mxu0 %v345
    %449 = vmatmul.bf16.gmra.mxu0 %v195
    %v450 = vpop.f32.mrf.mxu0
    %v451 = vadd.f32 %v186, %v450
    %v452 = vpop.f32.mrf.mxu0
    %453 = vdwg.mxu0
    %454 = vmatpush.bf16.msra.mxu0 %v375
    %455 = vmatpush.bf16.msra.mxu0 %v373
    %456 = vmatpush.bf16.msra.mxu0 %v371
    %457 = vmatpush.bf16.msra.mxu0 %v369
    %458 = vmatpush.bf16.msra.mxu0 %v367
    %459 = vmatpush.bf16.msra.mxu0 %v365
    %460 = vmatpush.bf16.msra.mxu0 %v363
    %461 = vmatpush.bf16.msra.mxu0 %v361
    %462 = vmatmul.bf16.gmra.mxu0 %v196
    %v463 = vpop.f32.mrf.mxu0
    %v464 = vadd.f32 %v451, %v463
    %v465 = vpop.f32.mrf.mxu0
    %466 = vdwg.mxu0
    %467 = vmatpush.bf16.msra.mxu0 %v391
    %468 = vmatpush.bf16.msra.mxu0 %v389
    %469 = vmatpush.bf16.msra.mxu0 %v387
    %470 = vmatpush.bf16.msra.mxu0 %v385
    %471 = vmatpush.bf16.msra.mxu0 %v383
    %472 = vmatpush.bf16.msra.mxu0 %v381
    %473 = vmatpush.bf16.msra.mxu0 %v379
    %474 = vmatpush.bf16.msra.mxu0 %v377
    %475 = vmatmul.bf16.gmra.mxu0 %v197
    %v476 = vpop.f32.mrf.mxu0
    %v477 = vadd.f32 %v464, %v476
    %v478 = vpop.f32.mrf.mxu0
    %479 = vdwg.mxu0
    %480 = vmatpush.bf16.msra.mxu0 %v360
    %481 = vmatpush.bf16.msra.mxu0 %v358
    %482 = vmatpush.bf16.msra.mxu0 %v356
    %483 = vmatpush.bf16.msra.mxu0 %v354
    %484 = vmatpush.bf16.msra.mxu0 %v352
    %485 = vmatpush.bf16.msra.mxu0 %v350
    %486 = vmatpush.bf16.msra.mxu0 %v348
    %487 = vmatpush.bf16.msra.mxu0 %v346
    %488 = vmatmul.bf16.gmra.mxu0 %v195
    %v489 = vpop.f32.mrf.mxu0
    %v490 = vadd.f32 %v187, %v489
    %v491 = vpop.f32.mrf.mxu0
    %492 = vdwg.mxu0
    %493 = vmatpush.bf16.msra.mxu0 %v376
    %494 = vmatpush.bf16.msra.mxu0 %v374
    %495 = vmatpush.bf16.msra.mxu0 %v372
    %496 = vmatpush.bf16.msra.mxu0 %v370
    %497 = vmatpush.bf16.msra.mxu0 %v368
    %498 = vmatpush.bf16.msra.mxu0 %v366
    %499 = vmatpush.bf16.msra.mxu0 %v364
    %500 = vmatpush.bf16.msra.mxu0 %v362
    %501 = vmatmul.bf16.gmra.mxu0 %v196
    %v502 = vpop.f32.mrf.mxu0
    %v503 = vadd.f32 %v490, %v502
    %v504 = vpop.f32.mrf.mxu0
    %505 = vdwg.mxu0
    %506 = vmatpush.bf16.msra.mxu0 %v392
    %507 = vmatpush.bf16.msra.mxu0 %v390
    %508 = vmatpush.bf16.msra.mxu0 %v388
    %509 = vmatpush.bf16.msra.mxu0 %v386
    %510 = vmatpush.bf16.msra.mxu0 %v384
    %511 = vmatpush.bf16.msra.mxu0 %v382
    %512 = vmatpush.bf16.msra.mxu0 %v380
    %513 = vmatpush.bf16.msra.mxu0 %v378
    %514 = vmatmul.bf16.gmra.mxu0 %v197
    %v515 = vpop.f32.mrf.mxu0
    %v516 = vadd.f32 %v503, %v515
    %v517 = vpop.f32.mrf.mxu0
    %518 = vdwg.mxu0
    %v519 = vmax.f32 %v477, 0.0
    %v520 = vmax.f32 %v516, 0.0
    %v521 = vpack.c.bf16 %v519, %v519
    %v522 = vpack.c.bf16 %v520, %v520
    %v523 = vld [vmem:[#allocation9] sm:$0xff]
    %v524 = vld [vmem:[#allocation9 + $0x8] sm:$0xff]
    %v525 = vld [vmem:[#allocation9 + $0x10] sm:$0xff]
    %v526 = vld [vmem:[#allocation9 + $0x18] sm:$0xff]
    %v527 = vld [vmem:[#allocation9 + $0x20] sm:$0xff]
    %v528 = vld [vmem:[#allocation9 + $0x28] sm:$0xff]
    %v529 = vld [vmem:[#allocation9 + $0x30] sm:$0xff]
    %v530 = vld [vmem:[#allocation9 + $0x38] sm:$0xff]
    %v531 = vld [vmem:[#allocation9 + $0x40] sm:$0xff]
    %v532 = vld [vmem:[#allocation9 + $0x48] sm:$0xff]
    %v533 = vld [vmem:[#allocation9 + $0x50] sm:$0xff]
    %v534 = vld [vmem:[#allocation9 + $0x58] sm:$0xff]
    %v535 = vld [vmem:[#allocation9 + $0x60] sm:$0xff]
    %v536 = vld [vmem:[#allocation9 + $0x68] sm:$0xff]
    %v537 = vld [vmem:[#allocation9 + $0x70] sm:$0xff]
    %v538 = vld [vmem:[#allocation9 + $0x78] sm:$0xff]
    %v539 = vld [vmem:[#allocation9 + $0x80] sm:$0xff]
    %v540 = vld [vmem:[#allocation9 + $0x88] sm:$0xff]
    %v541 = vld [vmem:[#allocation9 + $0x90] sm:$0xff]
    %v542 = vld [vmem:[#allocation9 + $0x98] sm:$0xff]
    %v543 = vld [vmem:[#allocation9 + $0xa0] sm:$0xff]
    %v544 = vld [vmem:[#allocation9 + $0xa8] sm:$0xff]
    %v545 = vld [vmem:[#allocation9 + $0xb0] sm:$0xff]
    %v546 = vld [vmem:[#allocation9 + $0xb8] sm:$0xff]
    %v547 = vld [vmem:[#allocation9 + $0xc0] sm:$0xff]
    %v548 = vld [vmem:[#allocation9 + $0xc8] sm:$0xff]
    %v549 = vld [vmem:[#allocation9 + $0xd0] sm:$0xff]
    %v550 = vld [vmem:[#allocation9 + $0xd8] sm:$0xff]
    %v551 = vld [vmem:[#allocation9 + $0xe0] sm:$0xff]
    %v552 = vld [vmem:[#allocation9 + $0xe8] sm:$0xff]
    %v553 = vld [vmem:[#allocation9 + $0xf0] sm:$0xff]
    %v554 = vld [vmem:[#allocation9 + $0xf8] sm:$0xff]
    %v555 = vld [vmem:[%s4] sm:$0x3]
    %v557 = vperm.slane %v555, 0
    %v558 = vperm.slane %v555, 1
    %v593 = vunpack.c.l.b16 %v523
    %v594 = vunpack.c.h.b16 %v523
    %v595 = vunpack.c.l.b16 %v524
    %v596 = vunpack.c.h.b16 %v524
    %v597 = vunpack.c.l.b16 %v525
    %v598 = vunpack.c.h.b16 %v525
    %v599 = vunpack.c.l.b16 %v526
    %v600 = vunpack.c.h.b16 %v526
    %v601 = vunpack.c.l.b16 %v527
    %v602 = vunpack.c.h.b16 %v527
    %v603 = vunpack.c.l.b16 %v528
    %v604 = vunpack.c.h.b16 %v528
    %v605 = vunpack.c.l.b16 %v529
    %v606 = vunpack.c.h.b16 %v529
    %v607 = vunpack.c.l.b16 %v530
    %v608 = vunpack.c.h.b16 %v530
    %v609 = vunpack.c.l.b16 %v531
    %v610 = vunpack.c.h.b16 %v531
    %v611 = vunpack.c.l.b16 %v532
    %v612 = vunpack.c.h.b16 %v532
    %v613 = vunpack.c.l.b16 %v533
    %v614 = vunpack.c.h.b16 %v533
    %v615 = vunpack.c.l.b16 %v534
    %v616 = vunpack.c.h.b16 %v534
    %v617 = vunpack.c.l.b16 %v535
    %v618 = vunpack.c.h.b16 %v535
    %v619 = vunpack.c.l.b16 %v536
    %v620 = vunpack.c.h.b16 %v536
    %v621 = vunpack.c.l.b16 %v537
    %v622 = vunpack.c.h.b16 %v537
    %v623 = vunpack.c.l.b16 %v538
    %v624 = vunpack.c.h.b16 %v538
    %v625 = vunpack.c.l.b16 %v539
    %v626 = vunpack.c.h.b16 %v539
    %v627 = vunpack.c.l.b16 %v540
    %v628 = vunpack.c.h.b16 %v540
    %v629 = vunpack.c.l.b16 %v541
    %v630 = vunpack.c.h.b16 %v541
    %v631 = vunpack.c.l.b16 %v542
    %v632 = vunpack.c.h.b16 %v542
    %v633 = vunpack.c.l.b16 %v543
    %v634 = vunpack.c.h.b16 %v543
    %v635 = vunpack.c.l.b16 %v544
    %v636 = vunpack.c.h.b16 %v544
    %v637 = vunpack.c.l.b16 %v545
    %v638 = vunpack.c.h.b16 %v545
    %v639 = vunpack.c.l.b16 %v546
    %v640 = vunpack.c.h.b16 %v546
    %v641 = vunpack.c.l.b16 %v547
    %v642 = vunpack.c.h.b16 %v547
    %v643 = vunpack.c.l.b16 %v548
    %v644 = vunpack.c.h.b16 %v548
    %v645 = vunpack.c.l.b16 %v549
    %v646 = vunpack.c.h.b16 %v549
    %v647 = vunpack.c.l.b16 %v550
    %v648 = vunpack.c.h.b16 %v550
    %v649 = vunpack.c.l.b16 %v551
    %v650 = vunpack.c.h.b16 %v551
    %v651 = vunpack.c.l.b16 %v552
    %v652 = vunpack.c.h.b16 %v552
    %v653 = vunpack.c.l.b16 %v553
    %v654 = vunpack.c.h.b16 %v553
    %v655 = vunpack.c.l.b16 %v554
    %v656 = vunpack.c.h.b16 %v554
    %v657 = vpack.c.b16 %v595, %v593
    %v658 = vpack.c.b16 %v596, %v594
    %v659 = vpack.c.b16 %v599, %v597
    %v660 = vpack.c.b16 %v600, %v598
    %v661 = vpack.c.b16 %v603, %v601
    %v662 = vpack.c.b16 %v604, %v602
    %v663 = vpack.c.b16 %v607, %v605
    %v664 = vpack.c.b16 %v608, %v606
    %v665 = vpack.c.b16 %v611, %v609
    %v666 = vpack.c.b16 %v612, %v610
    %v667 = vpack.c.b16 %v615, %v613
    %v668 = vpack.c.b16 %v616, %v614
    %v669 = vpack.c.b16 %v619, %v617
    %v670 = vpack.c.b16 %v620, %v618
    %v671 = vpack.c.b16 %v623, %v621
    %v672 = vpack.c.b16 %v624, %v622
    %v673 = vpack.c.b16 %v627, %v625
    %v674 = vpack.c.b16 %v628, %v626
    %v675 = vpack.c.b16 %v631, %v629
    %v676 = vpack.c.b16 %v632, %v630
    %v677 = vpack.c.b16 %v635, %v633
    %v678 = vpack.c.b16 %v636, %v634
    %v679 = vpack.c.b16 %v639, %v637
    %v680 = vpack.c.b16 %v640, %v638
    %v681 = vpack.c.b16 %v643, %v641
    %v682 = vpack.c.b16 %v644, %v642
    %v683 = vpack.c.b16 %v647, %v645
    %v684 = vpack.c.b16 %v648, %v646
    %v685 = vpack.c.b16 %v651, %v649
    %v686 = vpack.c.b16 %v652, %v650
    %v687 = vpack.c.b16 %v655, %v653
    %v688 = vpack.c.b16 %v656, %v654
    %721 = vmatpush.bf16.msra.mxu0 %v671
    %722 = vmatpush.bf16.msra.mxu0 %v669
    %723 = vmatpush.bf16.msra.mxu0 %v667
    %724 = vmatpush.bf16.msra.mxu0 %v665
    %725 = vmatpush.bf16.msra.mxu0 %v663
    %726 = vmatpush.bf16.msra.mxu0 %v661
    %727 = vmatpush.bf16.msra.mxu0 %v659
    %728 = vmatpush.bf16.msra.mxu0 %v657
    %729 = vmatmul.bf16.gmra.mxu0 %v521
    %v730 = vpop.f32.mrf.mxu0
    %v731 = vadd.f32 %v557, %v730
    %v732 = vpop.f32.mrf.mxu0
    %733 = vdwg.mxu0
    %734 = vmatpush.bf16.msra.mxu0 %v687
    %735 = vmatpush.bf16.msra.mxu0 %v685
    %736 = vmatpush.bf16.msra.mxu0 %v683
    %737 = vmatpush.bf16.msra.mxu0 %v681
    %738 = vmatpush.bf16.msra.mxu0 %v679
    %739 = vmatpush.bf16.msra.mxu0 %v677
    %740 = vmatpush.bf16.msra.mxu0 %v675
    %741 = vmatpush.bf16.msra.mxu0 %v673
    %742 = vmatmul.bf16.gmra.mxu0 %v522
    %v743 = vpop.f32.mrf.mxu0
    %v744 = vadd.f32 %v731, %v743
    %v745 = vpop.f32.mrf.mxu0
    %746 = vdwg.mxu0
    %747 = vmatpush.bf16.msra.mxu0 %v672
    %748 = vmatpush.bf16.msra.mxu0 %v670
    %749 = vmatpush.bf16.msra.mxu0 %v668
    %750 = vmatpush.bf16.msra.mxu0 %v666
    %751 = vmatpush.bf16.msra.mxu0 %v664
    %752 = vmatpush.bf16.msra.mxu0 %v662
    %753 = vmatpush.bf16.msra.mxu0 %v660
    %754 = vmatpush.bf16.msra.mxu0 %v658
    %755 = vmatmul.bf16.gmra.mxu0 %v521
    %v756 = vpop.f32.mrf.mxu0
    %v757 = vadd.f32 %v558, %v756
    %v758 = vpop.f32.mrf.mxu0
    %759 = vdwg.mxu0
    %760 = vmatpush.bf16.msra.mxu0 %v688
    %761 = vmatpush.bf16.msra.mxu0 %v686
    %762 = vmatpush.bf16.msra.mxu0 %v684
    %763 = vmatpush.bf16.msra.mxu0 %v682
    %764 = vmatpush.bf16.msra.mxu0 %v680
    %765 = vmatpush.bf16.msra.mxu0 %v678
    %766 = vmatpush.bf16.msra.mxu0 %v676
    %767 = vmatpush.bf16.msra.mxu0 %v674
    %768 = vmatmul.bf16.gmra.mxu0 %v522
    %v769 = vpop.f32.mrf.mxu0
    %v770 = vadd.f32 %v757, %v769
    %v771 = vpop.f32.mrf.mxu0
    %772 = vdwg.mxu0
    %v773 = vmax.f32 %v744, 0.0
    %v774 = vmax.f32 %v770, 0.0
    %v775 = vpack.c.bf16 %v773, %v773
    %v776 = vpack.c.bf16 %v774, %v774
    %v777 = vld [vmem:[#allocation11] sm:$0xf]
    %v778 = vld [vmem:[#allocation11 + $0x4] sm:$0xf]
    %v779 = vld [vmem:[#allocation11 + $0x8] sm:$0xf]
    %v780 = vld [vmem:[#allocation11 + $0xc] sm:$0xf]
    %v781 = vld [vmem:[#allocation11 + $0x10] sm:$0xf]
    %v782 = vld [vmem:[#allocation11 + $0x14] sm:$0xf]
    %v783 = vld [vmem:[#allocation11 + $0x18] sm:$0xf]
    %v784 = vld [vmem:[#allocation11 + $0x1c] sm:$0xf]
    %v785 = vld [vmem:[#allocation11 + $0x20] sm:$0xf]
    %v786 = vld [vmem:[#allocation11 + $0x24] sm:$0xf]
    %v787 = vld [vmem:[#allocation11 + $0x28] sm:$0xf]
    %v788 = vld [vmem:[#allocation11 + $0x2c] sm:$0xf]
    %v789 = vld [vmem:[#allocation11 + $0x30] sm:$0xf]
    %v790 = vld [vmem:[#allocation11 + $0x34] sm:$0xf]
    %v791 = vld [vmem:[#allocation11 + $0x38] sm:$0xf]
    %v792 = vld [vmem:[#allocation11 + $0x3c] sm:$0xf]
    %v793 = vld [vmem:[#allocation11 + $0x40] sm:$0xf]
    %v794 = vld [vmem:[#allocation11 + $0x44] sm:$0xf]
    %v795 = vld [vmem:[#allocation11 + $0x48] sm:$0xf]
    %v796 = vld [vmem:[#allocation11 + $0x4c] sm:$0xf]
    %v797 = vld [vmem:[#allocation11 + $0x50] sm:$0xf]
    %v798 = vld [vmem:[#allocation11 + $0x54] sm:$0xf]
    %v799 = vld [vmem:[#allocation11 + $0x58] sm:$0xf]
    %v800 = vld [vmem:[#allocation11 + $0x5c] sm:$0xf]
    %v801 = vld [vmem:[#allocation11 + $0x60] sm:$0xf]
    %v802 = vld [vmem:[#allocation11 + $0x64] sm:$0xf]
    %v803 = vld [vmem:[#allocation11 + $0x68] sm:$0xf]
    %v804 = vld [vmem:[#allocation11 + $0x6c] sm:$0xf]
    %v805 = vld [vmem:[#allocation11 + $0x70] sm:$0xf]
    %v806 = vld [vmem:[#allocation11 + $0x74] sm:$0xf]
    %v807 = vld [vmem:[#allocation11 + $0x78] sm:$0xf]
    %v808 = vld [vmem:[#allocation11 + $0x7c] sm:$0xf]
    %v809 = vld [vmem:[%s6] sm:$0x1]
    %v811 = vperm.slane %v809, 0
    %v845 = vunpack.c.l.b16 %v777
    %v846 = vunpack.c.l.b16 %v778
    %v847 = vunpack.c.l.b16 %v779
    %v848 = vunpack.c.l.b16 %v780
    %v849 = vunpack.c.l.b16 %v781
    %v850 = vunpack.c.l.b16 %v782
    %v851 = vunpack.c.l.b16 %v783
    %v852 = vunpack.c.l.b16 %v784
    %v853 = vunpack.c.l.b16 %v785
    %v854 = vunpack.c.l.b16 %v786
    %v855 = vunpack.c.l.b16 %v787
    %v856 = vunpack.c.l.b16 %v788
    %v857 = vunpack.c.l.b16 %v789
    %v858 = vunpack.c.l.b16 %v790
    %v859 = vunpack.c.l.b16 %v791
    %v860 = vunpack.c.l.b16 %v792
    %v861 = vunpack.c.l.b16 %v793
    %v862 = vunpack.c.l.b16 %v794
    %v863 = vunpack.c.l.b16 %v795
    %v864 = vunpack.c.l.b16 %v796
    %v865 = vunpack.c.l.b16 %v797
    %v866 = vunpack.c.l.b16 %v798
    %v867 = vunpack.c.l.b16 %v799
    %v868 = vunpack.c.l.b16 %v800
    %v869 = vunpack.c.l.b16 %v801
    %v870 = vunpack.c.l.b16 %v802
    %v871 = vunpack.c.l.b16 %v803
    %v872 = vunpack.c.l.b16 %v804
    %v873 = vunpack.c.l.b16 %v805
    %v874 = vunpack.c.l.b16 %v806
    %v875 = vunpack.c.l.b16 %v807
    %v876 = vunpack.c.l.b16 %v808
    %v877 = vpack.c.b16 %v846, %v845
    %v878 = vpack.c.b16 %v848, %v847
    %v879 = vpack.c.b16 %v850, %v849
    %v880 = vpack.c.b16 %v852, %v851
    %v881 = vpack.c.b16 %v854, %v853
    %v882 = vpack.c.b16 %v856, %v855
    %v883 = vpack.c.b16 %v858, %v857
    %v884 = vpack.c.b16 %v860, %v859
    %v885 = vpack.c.b16 %v862, %v861
    %v886 = vpack.c.b16 %v864, %v863
    %v887 = vpack.c.b16 %v866, %v865
    %v888 = vpack.c.b16 %v868, %v867
    %v889 = vpack.c.b16 %v870, %v869
    %v890 = vpack.c.b16 %v872, %v871
    %v891 = vpack.c.b16 %v874, %v873
    %v892 = vpack.c.b16 %v876, %v875
    %909 = vmatpush.bf16.msra.mxu0 %v884
    %910 = vmatpush.bf16.msra.mxu0 %v883
    %911 = vmatpush.bf16.msra.mxu0 %v882
    %912 = vmatpush.bf16.msra.mxu0 %v881
    %913 = vmatpush.bf16.msra.mxu0 %v880
    %914 = vmatpush.bf16.msra.mxu0 %v879
    %915 = vmatpush.bf16.msra.mxu0 %v878
    %916 = vmatpush.bf16.msra.mxu0 %v877
    %917 = vmatmul.bf16.gmra.mxu0 %v775
    %v918 = vpop.f32.mrf.mxu0
    %v919 = vadd.f32 %v811, %v918
    %v920 = vpop.f32.mrf.mxu0
    %921 = vdwg.mxu0
    %922 = vmatpush.bf16.msra.mxu0 %v892
    %923 = vmatpush.bf16.msra.mxu0 %v891
    %924 = vmatpush.bf16.msra.mxu0 %v890
    %925 = vmatpush.bf16.msra.mxu0 %v889
    %926 = vmatpush.bf16.msra.mxu0 %v888
    %927 = vmatpush.bf16.msra.mxu0 %v887
    %928 = vmatpush.bf16.msra.mxu0 %v886
    %929 = vmatpush.bf16.msra.mxu0 %v885
    %930 = vmatmul.bf16.gmra.mxu0 %v776
    %v931 = vpop.f32.mrf.mxu0
    %v932 = vadd.f32 %v919, %v931
    %v933 = vpop.f32.mrf.mxu0
    %934 = vdwg.mxu0
    %v935 = vmax.f32 %v932, 0.0
    %v936 = vpack.c.bf16 %v935, %v935
    %v937 = vld [vmem:[#allocation12] sm:$0xf]
    %v938 = vld [vmem:[#allocation12 + $0x4] sm:$0xf]
    %v939 = vld [vmem:[#allocation12 + $0x8] sm:$0xf]
    %v940 = vld [vmem:[#allocation12 + $0xc] sm:$0xf]
    %v941 = vld [vmem:[#allocation12 + $0x10] sm:$0xf]
    %v942 = vld [vmem:[#allocation12 + $0x14] sm:$0xf]
    %v943 = vld [vmem:[#allocation12 + $0x18] sm:$0xf]
    %v944 = vld [vmem:[#allocation12 + $0x1c] sm:$0xf]
    %v945 = vld [vmem:[#allocation12 + $0x20] sm:$0xf]
    %v946 = vld [vmem:[#allocation12 + $0x24] sm:$0xf]
    %v947 = vld [vmem:[#allocation12 + $0x28] sm:$0xf]
    %v948 = vld [vmem:[#allocation12 + $0x2c] sm:$0xf]
    %v949 = vld [vmem:[#allocation12 + $0x30] sm:$0xf]
    %v950 = vld [vmem:[#allocation12 + $0x34] sm:$0xf]
    %v951 = vld [vmem:[#allocation12 + $0x38] sm:$0xf]
    %v952 = vld [vmem:[#allocation12 + $0x3c] sm:$0xf]
    %v953 = vld [vmem:[%s8] sm:$0x1]
    %v955 = vperm.slane %v953, 0
    %v973 = vunpack.c.l.b16 %v937
    %v974 = vunpack.c.l.b16 %v938
    %v975 = vunpack.c.l.b16 %v939
    %v976 = vunpack.c.l.b16 %v940
    %v977 = vunpack.c.l.b16 %v941
    %v978 = vunpack.c.l.b16 %v942
    %v979 = vunpack.c.l.b16 %v943
    %v980 = vunpack.c.l.b16 %v944
    %v981 = vunpack.c.l.b16 %v945
    %v982 = vunpack.c.l.b16 %v946
    %v983 = vunpack.c.l.b16 %v947
    %v984 = vunpack.c.l.b16 %v948
    %v985 = vunpack.c.l.b16 %v949
    %v986 = vunpack.c.l.b16 %v950
    %v987 = vunpack.c.l.b16 %v951
    %v988 = vunpack.c.l.b16 %v952
    %v989 = vpack.c.b16 %v974, %v973
    %v990 = vpack.c.b16 %v976, %v975
    %v991 = vpack.c.b16 %v978, %v977
    %v992 = vpack.c.b16 %v980, %v979
    %v993 = vpack.c.b16 %v982, %v981
    %v994 = vpack.c.b16 %v984, %v983
    %v995 = vpack.c.b16 %v986, %v985
    %v996 = vpack.c.b16 %v988, %v987
    %1005 = vmatpush.bf16.msra.mxu0 %v996
    %1006 = vmatpush.bf16.msra.mxu0 %v995
    %1007 = vmatpush.bf16.msra.mxu0 %v994
    %1008 = vmatpush.bf16.msra.mxu0 %v993
    %1009 = vmatpush.bf16.msra.mxu0 %v992
    %1010 = vmatpush.bf16.msra.mxu0 %v991
    %1011 = vmatpush.bf16.msra.mxu0 %v990
    %1012 = vmatpush.bf16.msra.mxu0 %v989
    %1013 = vmatmul.bf16.gmra.mxu0 %v936
    %v1014 = vpop.f32.mrf.mxu0
    %v1015 = vadd.f32 %v955, %v1014
    %v1016 = vpop.f32.mrf.mxu0
    %1017 = vdwg.mxu0
    %v1018 = vxor.u32 %v1015, 2147483648
    %v1019 = vmul.f32 %v1018, 1.442695
    %v1020 = vpow.pop %v1019
    %v1021 = vadd.f32 %v1020, 1.0
    %v1022 = vrcp.pop %v1021
    %v1023 = vmul.f32 %v1021, %v1022
    %v1024 = vsub.f32 1.0, %v1023
    %v1025 = vmul.f32 %v1022, %v1024
    %v1026 = vadd.f32 %v1022, %v1025
    %vm1027 = vweird.f32 %v1021
    %vm1028 = vweird.f32 %v1022
    %vm1029 = vmor %vm1027, %vm1028
    %v1030 = vsel %vm1029, %v1022, %v1026
    %v1031 = vand.u32 2147483647, %v1021
    %vm1032 = vcmp.eq.f32.partialorder %v1031, 8.507059e+37
    %v1033 = vand.u32 %v1021, 2147483648
    %v1034 = vor.u32 1.1754944e-38, %v1033
    %v1035 = vsel %vm1032, %v1034, %v1030
    %v1036 = vmul.f32 1.0, %v1035
    %v1037 = vpack.c.bf16 %v1036, %v1036
    %1038 = vst [vmem:[#allocation14] sm:$0xf] %v1037
    // Predicated region
    $region62: #{_gioco_forward.1} parent=1 // pred_check
      _
    $region63: #{_gioco_forward.1} parent=1 // pred_check_branch
      %1040 = sbr.rel (0) target = $region65
    $region64: #{_gioco_forward.1} parent=1 // pred_region
      %1042 = vsyncadd [#allocation5], 0
      %s1044 = sshll.u32 [#allocation14], 4
      %s1045 = int_to_ptr.vmem [resolvable:$true] %s1044
      %s1046 = sshll.u32 %s9, 4
      %s1047 = int_to_ptr.hbm [resolvable:$true] %s1046
      %1049 = dma.vmem_to_hbm [thread:$0]  %s1045, 64, %s1047, [#allocation5]
    $region65: #{_gioco_forward.1} parent=1 // pred_fallthru
      _
    // Predicated region
    $region66: #{_gioco_forward.1} parent=1 // pred_check
      _
    $region67: #{_gioco_forward.1} parent=1 // pred_check_branch
      %1051 = sbr.rel (0) target = $region69
    $region68: #{_gioco_forward.1} parent=1 // pred_region
      %1053 = dma.done [#allocation5], 64
    $region69: #{_gioco_forward.1} parent=1 // pred_fallthru
      _
    %1054 = vsyncpa [#allocation4], 1
    %1055 = vsyncpa [#allocation7], 1
    %1056 = vsyncpa [#allocation10], 1
    %1057 = vsyncpa [#allocation13], 1
    %1058 = vsyncpa [#allocation5], 1

</llo_original>
